<compile_context>
chip_gen: v7x
topology: tpu7x:2x2x1
jax: 0.10.0
libtpu: 0.0.40
codegen_flags: <defaults>
</compile_context>

<pallas_src>
import functools

import jax
import jax.numpy as jnp
from jax import lax
from jax.experimental import pallas as pl
from jax.experimental.pallas import tpu as pltpu


def _round_up(v, m):
    return -(-v // m) * m


def _conv_bn_relu_kernel(x_ref, w_ref, b_ref, o_ref, rhs_ref, *, wp, h, c_in, group):
    """Fused 3x3 conv + folded-BN + ReLU over one flattened, padded image.

    x_ref  : [1, C_in, L]         f32 padded image, flattened rows (row stride wp)
    w_ref  : [C_out, 9*group]     f32 folded weights, col = tap*group + cin, tap = i*3+j
    b_ref  : [C_out, 1]           f32 folded bias
    o_ref  : [1, C_out, h*wp]     conv+BN+ReLU output, flat rows (lane-dense, q % 128 == 0)
    rhs_ref: [9*group, h*wp]      VMEM scratch: the fused-dot rhs (9 shifted copies)
    """
    q = h * wp
    x = x_ref[0]                                       # [C_in, L] f32

    # Clear the scratch every step (pad rows between the tap groups must be zero;
    # the scratch persists across grid steps / cores).  A handful of vreg stores.
    rhs_ref[...] = jnp.zeros_like(rhs_ref)
    for t in range(9):
        i, j = divmod(t, 3)
        off = i * wp + j                               # tap (i, j) = constant flat shift
        rhs_ref[t * group:t * group + c_in, :] = x[:, off:off + q]

    # One MXU dot: [C_out, 9*group] @ [9*group, q] -> [C_out, q], f32 accumulation.
    acc = jnp.dot(w_ref[...], rhs_ref[...], preferred_element_type=jnp.float32)
    acc = jnp.maximum(acc + b_ref[...], 0.0)           # bias + ReLU (commutes w/ shuffle)
    o_ref[0] = acc.astype(o_ref.dtype)


@functools.partial(jax.jit, static_argnames=("scale",))
def pixel_shuffle_upsampling(x, w, b, gamma, beta, running_mean, running_var,
                             *, scale=2, eps=1e-5):
    """x: [N, C_in, H, W]; w: [C_in*scale^2, C_in, 3, 3]; b/gamma/beta/mean/var: [C_in*scale^2]."""
    n, c_in, h, wdt = x.shape
    c_out = c_in * scale * scale
    kh = kw = 3
    assert w.shape == (c_out, c_in, kh, kw)

    # ---- Fold BatchNorm2d (inference affine) into the conv weight / bias. ----
    inv_std = gamma / jnp.sqrt(running_var + eps)                      # [C_out]
    w_f = w * inv_std[:, None, None, None]
    b_f = (b - running_mean) * inv_std + beta

    # ---- Pick padded row stride wp: >= W+2 (conv halo) and h*wp % 128 == 0
    #      so output stores are lane-dense (unmasked). ----
    wp = _round_up(wdt + 2, 8)
    while (h * wp) % 128 != 0:
        wp += 8
    q = h * wp

    # ---- Pad (halo + lane padding) and flatten rows: one fused XLA pass. ----
    xp = jnp.pad(x, ((0, 0), (0, 0), (1, 1), (1, wp - wdt - 1)))       # [N, C_in, H+2, wp]
    l_flat = (h + 2) * wp
    l_pad = _round_up(l_flat + 2, 128)                                 # +2 slack for tap (2,2)
    xf = jnp.pad(xp.reshape(n, c_in, l_flat), ((0, 0), (0, 0), (0, l_pad - l_flat)))

    # ---- Lane-dense 2-D folded weights [C_out, 9*group]; group = C_in padded to 8
    #      so the in-kernel rhs stores are sublane-aligned (pad columns are zero). ----
    group = _round_up(c_in, 8)
    wt = jnp.transpose(w_f, (0, 2, 3, 1)).reshape(c_out, kh * kw, c_in)
    wk = jnp.zeros((c_out, kh * kw, group), jnp.float32).at[:, :, :c_in].set(wt)
    wk = wk.reshape(c_out, kh * kw * group)
    bk = b_f.reshape(c_out, 1).astype(jnp.float32)

    flops = 2 * n * c_out * (kh * kw * c_in) * q
    bytes_accessed = xf.size * 4 + wk.size * 4 + bk.size * 4 + n * c_out * q * 4

    out = pl.pallas_call(
        functools.partial(_conv_bn_relu_kernel, wp=wp, h=h, c_in=c_in, group=group),
        out_shape=jax.ShapeDtypeStruct((n, c_out, q), x.dtype),
        grid_spec=pltpu.PrefetchScalarGridSpec(
            num_scalar_prefetch=0,
            grid=(n,),                                                  # one image / step
            in_specs=[
                pl.BlockSpec((1, c_in, l_pad), lambda i: (i, 0, 0)),    # flattened image
                pl.BlockSpec((c_out, kh * kw * group), lambda i: (0, 0)),  # resident weights
                pl.BlockSpec((c_out, 1), lambda i: (0, 0)),             # resident bias
            ],
            out_specs=pl.BlockSpec((1, c_out, q), lambda i: (i, 0, 0)),
            scratch_shapes=[pltpu.VMEM((kh * kw * group, q), jnp.float32)],
        ),
        compiler_params=pltpu.CompilerParams(dimension_semantics=("parallel",)),
        cost_estimate=pl.CostEstimate(flops=flops, transcendentals=0,
                                      bytes_accessed=bytes_accessed),
    )(xf, wk, bk)

    # ---- Drop lane padding + PixelShuffle: collapses to one fused transpose op. ----
    out = out.reshape(n, c_out, h, wp)[..., :wdt]                      # [N, C_out, H, W]
    r = scale
    out = out.reshape(n, c_in, r, r, h, wdt)
    out = jnp.transpose(out, (0, 1, 4, 2, 5, 3))                       # [N, C, H, r, W, r]
    return out.reshape(n, c_in, h * r, wdt * r)


def _reference(x, w, b, gamma, beta, running_mean, running_var, *, scale=2, eps=1e-5):
    """Pure-JAX reference matching the PyTorch forward (BN in eval mode)."""
    dn = ("NCHW", "OIHW", "NCHW")
    conv = lax.conv_general_dilated(x, w, (1, 1), ((1, 1), (1, 1)), dimension_numbers=dn)
    conv = conv + b.reshape(1, -1, 1, 1)
    s = (gamma / jnp.sqrt(running_var + eps)).reshape(1, -1, 1, 1)
    bn = (conv - running_mean.reshape(1, -1, 1, 1)) * s + beta.reshape(1, -1, 1, 1)
    n, c_out, h, wdt = bn.shape
    c_in = c_out // (scale * scale)
    ps = bn.reshape(n, c_in, scale, scale, h, wdt)
    ps = jnp.transpose(ps, (0, 1, 4, 2, 5, 3)).reshape(n, c_in, h * scale, wdt * scale)
    return jnp.maximum(ps, 0.0)


if __name__ == "__main__":
    # pixelShuffleUpsampling(inputFilters=4, scailingFactor=2)
    N, C_IN, H, W = 2, 4, 16, 16
    SCALE = 2
    C_OUT = C_IN * SCALE * SCALE

    key = jax.random.PRNGKey(0)
    kx, kw_, kb_, kg, kbe, km, kv = jax.random.split(key, 7)

    x = jax.random.normal(kx, (N, C_IN, H, W), dtype=jnp.float32)
    fan_in = C_IN * 3 * 3
    bound = 1.0 / fan_in ** 0.5
    w = jax.random.uniform(kw_, (C_OUT, C_IN, 3, 3), jnp.float32, -bound, bound)
    b = jax.random.uniform(kb_, (C_OUT,), jnp.float32, -bound, bound)
    gamma = jax.random.uniform(kg, (C_OUT,), jnp.float32, 0.5, 1.5)
    beta = jax.random.normal(kbe, (C_OUT,), jnp.float32) * 0.1
    running_mean = jax.random.normal(km, (C_OUT,), jnp.float32) * 0.1
    running_var = jax.random.uniform(kv, (C_OUT,), jnp.float32, 0.5, 1.5)

    out = pixel_shuffle_upsampling(x, w, b, gamma, beta, running_mean, running_var,
                                   scale=SCALE)
    out = jax.block_until_ready(out)

    ref = _reference(x, w, b, gamma, beta, running_mean, running_var, scale=SCALE)
    assert out.shape == (N, C_IN, H * SCALE, W * SCALE), out.shape
    err = float(jnp.max(jnp.abs(out - ref)))
    # f32 operands, f32 accumulation; tolerance covers possible bf16 MXU passes.
    assert jnp.allclose(out, ref, atol=3e-2, rtol=3e-2), err

    print("KERNEL_OK")
</pallas_src>

<mosaic_0001>
module attributes {stable_mosaic.version = 11 : i64} {
  func.func @_conv_bn_relu_kernel(%arg0: i32, %arg1: memref<1x4x512xf32, #tpu.memory_space<vmem>>, %arg2: memref<16x72xf32, #tpu.memory_space<vmem>>, %arg3: memref<16x1xf32, #tpu.memory_space<vmem>>, %arg4: memref<1x16x384xf32, #tpu.memory_space<vmem>>, %arg5: memref<72x384xf32, #tpu.memory_space<vmem>>) attributes {dimension_semantics = [#tpu.dimension_semantics<parallel>], iteration_bounds = array<i64: 2>, scalar_prefetch = 0 : i64, scratch_operands = 1 : i64, tpu.core_type = #tpu.core_type<tc>, window_params = [{transform_indices = @transform_0, window_bounds = array<i64: 1, 4, 512>}, {pipeline_mode = #tpu.pipeline_mode<synchronous>, transform_indices = @transform_1, window_bounds = array<i64: 16, 72>}, {pipeline_mode = #tpu.pipeline_mode<synchronous>, transform_indices = @transform_2, window_bounds = array<i64: 16, 1>}, {transform_indices = @transform_3, window_bounds = array<i64: 1, 16, 384>}]} {
    %c0 = arith.constant 0 : index
    %c0_0 = arith.constant 0 : index
    %c0_1 = arith.constant 0 : index
    %0 = vector.load %arg1[%c0, %c0_0, %c0_1] : memref<1x4x512xf32, #tpu.memory_space<vmem>>, vector<1x4x512xf32>
    %1 = vector.shape_cast %0 : vector<1x4x512xf32> to vector<4x512xf32>
    %cst = arith.constant 0.000000e+00 : f32
    %2 = vector.broadcast %cst : f32 to vector<72x384xf32>
    %c0_2 = arith.constant 0 : index
    %c0_3 = arith.constant 0 : index
    %3 = vector.load %arg5[%c0_2, %c0_3] : memref<72x384xf32, #tpu.memory_space<vmem>>, vector<72x384xf32>
    tpu.vector_store %arg5[%c0_2, %c0_3], %2 {strides = array<i32>} : memref<72x384xf32, #tpu.memory_space<vmem>>, vector<72x384xf32>,
    %4 = vector.extract_strided_slice %1 {offsets = [0, 0], sizes = [4, 384], strides = [1, 1]} : vector<4x512xf32> to vector<4x384xf32>
    %c0_4 = arith.constant 0 : index
    %c0_5 = arith.constant 0 : index
    %5 = vector.load %arg5[%c0_4, %c0_5] : memref<72x384xf32, #tpu.memory_space<vmem>>, vector<4x384xf32>
    tpu.vector_store %arg5[%c0_4, %c0_5], %4 {strides = array<i32>} : memref<72x384xf32, #tpu.memory_space<vmem>>, vector<4x384xf32>,
    %6 = vector.extract_strided_slice %1 {offsets = [0, 1], sizes = [4, 384], strides = [1, 1]} : vector<4x512xf32> to vector<4x384xf32>
    %c8 = arith.constant 8 : index
    %c0_6 = arith.constant 0 : index
    %7 = vector.load %arg5[%c8, %c0_6] : memref<72x384xf32, #tpu.memory_space<vmem>>, vector<4x384xf32>
    tpu.vector_store %arg5[%c8, %c0_6], %6 {strides = array<i32>} : memref<72x384xf32, #tpu.memory_space<vmem>>, vector<4x384xf32>,
    %8 = vector.extract_strided_slice %1 {offsets = [0, 2], sizes = [4, 384], strides = [1, 1]} : vector<4x512xf32> to vector<4x384xf32>
    %c16 = arith.constant 16 : index
    %c0_7 = arith.constant 0 : index
    %9 = vector.load %arg5[%c16, %c0_7] : memref<72x384xf32, #tpu.memory_space<vmem>>, vector<4x384xf32>
    tpu.vector_store %arg5[%c16, %c0_7], %8 {strides = array<i32>} : memref<72x384xf32, #tpu.memory_space<vmem>>, vector<4x384xf32>,
    %10 = vector.extract_strided_slice %1 {offsets = [0, 24], sizes = [4, 384], strides = [1, 1]} : vector<4x512xf32> to vector<4x384xf32>
    %c24 = arith.constant 24 : index
    %c0_8 = arith.constant 0 : index
    %11 = vector.load %arg5[%c24, %c0_8] : memref<72x384xf32, #tpu.memory_space<vmem>>, vector<4x384xf32>
    tpu.vector_store %arg5[%c24, %c0_8], %10 {strides = array<i32>} : memref<72x384xf32, #tpu.memory_space<vmem>>, vector<4x384xf32>,
    %12 = vector.extract_strided_slice %1 {offsets = [0, 25], sizes = [4, 384], strides = [1, 1]} : vector<4x512xf32> to vector<4x384xf32>
    %c32 = arith.constant 32 : index
    %c0_9 = arith.constant 0 : index
    %13 = vector.load %arg5[%c32, %c0_9] : memref<72x384xf32, #tpu.memory_space<vmem>>, vector<4x384xf32>
    tpu.vector_store %arg5[%c32, %c0_9], %12 {strides = array<i32>} : memref<72x384xf32, #tpu.memory_space<vmem>>, vector<4x384xf32>,
    %14 = vector.extract_strided_slice %1 {offsets = [0, 26], sizes = [4, 384], strides = [1, 1]} : vector<4x512xf32> to vector<4x384xf32>
    %c40 = arith.constant 40 : index
    %c0_10 = arith.constant 0 : index
    %15 = vector.load %arg5[%c40, %c0_10] : memref<72x384xf32, #tpu.memory_space<vmem>>, vector<4x384xf32>
    tpu.vector_store %arg5[%c40, %c0_10], %14 {strides = array<i32>} : memref<72x384xf32, #tpu.memory_space<vmem>>, vector<4x384xf32>,
    %16 = vector.extract_strided_slice %1 {offsets = [0, 48], sizes = [4, 384], strides = [1, 1]} : vector<4x512xf32> to vector<4x384xf32>
    %c48 = arith.constant 48 : index
    %c0_11 = arith.constant 0 : index
    %17 = vector.load %arg5[%c48, %c0_11] : memref<72x384xf32, #tpu.memory_space<vmem>>, vector<4x384xf32>
    tpu.vector_store %arg5[%c48, %c0_11], %16 {strides = array<i32>} : memref<72x384xf32, #tpu.memory_space<vmem>>, vector<4x384xf32>,
    %18 = vector.extract_strided_slice %1 {offsets = [0, 49], sizes = [4, 384], strides = [1, 1]} : vector<4x512xf32> to vector<4x384xf32>
    %c56 = arith.constant 56 : index
    %c0_12 = arith.constant 0 : index
    %19 = vector.load %arg5[%c56, %c0_12] : memref<72x384xf32, #tpu.memory_space<vmem>>, vector<4x384xf32>
    tpu.vector_store %arg5[%c56, %c0_12], %18 {strides = array<i32>} : memref<72x384xf32, #tpu.memory_space<vmem>>, vector<4x384xf32>,
    %20 = vector.extract_strided_slice %1 {offsets = [0, 50], sizes = [4, 384], strides = [1, 1]} : vector<4x512xf32> to vector<4x384xf32>
    %c64 = arith.constant 64 : index
    %c0_13 = arith.constant 0 : index
    %21 = vector.load %arg5[%c64, %c0_13] : memref<72x384xf32, #tpu.memory_space<vmem>>, vector<4x384xf32>
    tpu.vector_store %arg5[%c64, %c0_13], %20 {strides = array<i32>} : memref<72x384xf32, #tpu.memory_space<vmem>>, vector<4x384xf32>,
    %c0_14 = arith.constant 0 : index
    %c0_15 = arith.constant 0 : index
    %22 = vector.load %arg2[%c0_14, %c0_15] : memref<16x72xf32, #tpu.memory_space<vmem>>, vector<16x72xf32>
    %c0_16 = arith.constant 0 : index
    %c0_17 = arith.constant 0 : index
    %23 = vector.load %arg5[%c0_16, %c0_17] : memref<72x384xf32, #tpu.memory_space<vmem>>, vector<72x384xf32>
    %cst_18 = arith.constant dense<0.000000e+00> : vector<16x384xf32>
    %24 = tpu.matmul %22, %23, %cst_18 {dimension_numbers = #tpu.dot_dimension_numbers<[1], [0], [0], [1], [0, 0, 1, 1], [], []>} : vector<16x72xf32>, vector<72x384xf32>, vector<16x384xf32> -> vector<16x384xf32>
    %c0_19 = arith.constant 0 : index
    %c0_20 = arith.constant 0 : index
    %25 = vector.load %arg3[%c0_19, %c0_20] : memref<16x1xf32, #tpu.memory_space<vmem>>, vector<16x1xf32>
    %26 = vector.broadcast %25 : vector<16x1xf32> to vector<16x384xf32>
    %27 = arith.addf %24, %26 : vector<16x384xf32>
    %cst_21 = arith.constant 0.000000e+00 : f32
    %28 = vector.broadcast %cst_21 : f32 to vector<16x384xf32>
    %29 = arith.maximumf %27, %28 : vector<16x384xf32>
    %c0_22 = arith.constant 0 : index
    %c0_23 = arith.constant 0 : index
    %c0_24 = arith.constant 0 : index
    %30 = vector.load %arg4[%c0_22, %c0_23, %c0_24] : memref<1x16x384xf32, #tpu.memory_space<vmem>>, vector<1x16x384xf32>
    %31 = vector.shape_cast %30 : vector<1x16x384xf32> to vector<16x384xf32>
    %32 = vector.shape_cast %29 : vector<16x384xf32> to vector<1x16x384xf32>
    tpu.vector_store %arg4[%c0_22, %c0_23, %c0_24], %32 {strides = array<i32>} : memref<1x16x384xf32, #tpu.memory_space<vmem>>, vector<1x16x384xf32>,
    return
  }
  func.func @transform_0(%arg0: i32) -> (i32, i32, i32) {
    %c0_i32 = arith.constant 0 : i32
    %c0_i32_0 = arith.constant 0 : i32
    %c0_i32_1 = arith.constant 0 : i32
    return %arg0, %c0_i32, %c0_i32_0 : i32, i32, i32
  }
  func.func @transform_1(%arg0: i32) -> (i32, i32) {
    %c0_i32 = arith.constant 0 : i32
    %c0_i32_0 = arith.constant 0 : i32
    %c0_i32_1 = arith.constant 0 : i32
    return %c0_i32, %c0_i32_0 : i32, i32
  }
  func.func @transform_2(%arg0: i32) -> (i32, i32) {
    %c0_i32 = arith.constant 0 : i32
    %c0_i32_0 = arith.constant 0 : i32
    %c0_i32_1 = arith.constant 0 : i32
    return %c0_i32, %c0_i32_0 : i32, i32
  }
  func.func @transform_3(%arg0: i32) -> (i32, i32, i32) {
    %c0_i32 = arith.constant 0 : i32
    %c0_i32_0 = arith.constant 0 : i32
    %c0_i32_1 = arith.constant 0 : i32
    return %arg0, %c0_i32, %c0_i32_0 : i32, i32, i32
  }
}

</mosaic_0001>

<llo_original>
// kernel: pixel_shuffle_upsampling.1
$region0: #{pixel_shuffle_upsampling.1}
  #allocation0 [shape = 'u32[]', space=smem, size = 0x4, offset = 0x4, fixed_abs, tag = 'smem constant byte address 0x4 - core index']
  #allocation1 [shape = 'u32[144,128]{1,0:T(1,128)}', space=vmem, size = 0x12000, scoped, tag = 'internal scratch']
  #allocation2 [shape = 'f32[72,384]{1,0:T(8,128)}', space=vmem, size = 0x1b000, scoped, tag = 'scratch operand']
  %s0 = inlined_call_operand.vmem [shape: f32[2,4,512], index: 0, kind: input, shape index: {}]
  %s1 = inlined_call_operand.vmem [shape: f32[16,72], index: 1, kind: input, shape index: {}]
  %s2 = inlined_call_operand.vmem [shape: f32[16,1], index: 2, kind: input, shape index: {}]
  %s3 = inlined_call_operand.vmem [shape: f32[2,16,384], index: 3, kind: output, shape index: {}]
  %s4 = sld [smem:[#allocation0]]
  $region45: #{pixel_shuffle_upsampling.1} parent=0
    _
  %s6 = ssub.s32 1, %s4
  %s7 = scalar_select 0, %s6, %s4
  loop: start=0, step=1, limit=4
  $region2: #{pixel_shuffle_upsampling.1} parent=0 // loop_pre_header
    _
  $region3: #{pixel_shuffle_upsampling.1} parent=0 // loop_header
    %s9 = sphi 0, %s13
    %p10 = scmp.ge.s32.totalorder %s9, 4
    %s19 = sphi 0, %s21
    %s22 = sphi 0, %s19
    %s23 = sphi 0, %s22
    %s39 = sphi 0, %s23
    %s43 = sphi 0, %s43
    %s45 = sphi 0, %s43
    %s46 = sphi 0, %s45
    %s60 = sphi 0, %s46
    %s64 = sphi 0, %s64
    %s66 = sphi 0, %s64
    %s67 = sphi 0, %s66
    %s81 = sphi 0, %s67
    %s87 = sphi 0, %s89
    %s90 = sphi 0, %s87
    %s91 = sphi 0, %s90
    %s107 = sphi 0, %s91
  $region4: #{pixel_shuffle_upsampling.1} parent=0 // loop_header_branch
    %12 = sbr.rel (%p10) target = $region8
  $region5: #{pixel_shuffle_upsampling.1} parent=0 // loop_body
    %s14 = ssub.s32 %s9, 1
    %s15 = ssub.s32 %s9, 2
    %s16 = sadd.s32 %s9, 1
    %s17 = ssub.s32 %s9, %s16
    %p18 = scmp.eq.s32.totalorder %s17, 0
    %s20 = sadd.s32 %s19, 1
    %s21 = scalar_select %p18, %s19, %s20
    %p24 = pneg %p18
    %p25 = scmp.eq.s32.totalorder %s9, 1
    %p26 = por %p24, %p25
    %p27 = scmp.ne.s32.totalorder %s19, %s22
    %p28 = scmp.eq.s32.totalorder %s9, 0
    %p29 = por %p27, %p28
    %p30 = scmp.ne.s32.totalorder %s19, %s22
    %p31 = scmp.eq.s32.totalorder %s14, 1
    %p32 = por %p30, %p31
    %p33 = scmp.ne.s32.totalorder %s22, %s23
    %p34 = scmp.eq.s32.totalorder %s14, 0
    %p35 = por %p33, %p34
    %p36 = scmp.ne.s32.totalorder %s22, %s23
    %p37 = scmp.eq.s32.totalorder %s15, 1
    %p38 = por %p36, %p37
    %p40 = scmp.ne.s32.totalorder %s23, %s39
    %p41 = scmp.eq.s32.totalorder %s15, 0
    %p42 = por %p40, %p41
    %s44 = sadd.s32 %s43, 1
    %p47 = scmp.eq.s32.totalorder %s9, 1
    %p48 = scmp.ne.s32.totalorder %s43, %s45
    %p49 = scmp.eq.s32.totalorder %s9, 0
    %p50 = por %p48, %p49
    %p51 = scmp.ne.s32.totalorder %s43, %s45
    %p52 = scmp.eq.s32.totalorder %s14, 1
    %p53 = por %p51, %p52
    %p54 = scmp.ne.s32.totalorder %s45, %s46
    %p55 = scmp.eq.s32.totalorder %s14, 0
    %p56 = por %p54, %p55
    %p57 = scmp.ne.s32.totalorder %s45, %s46
    %p58 = scmp.eq.s32.totalorder %s15, 1
    %p59 = por %p57, %p58
    %p61 = scmp.ne.s32.totalorder %s46, %s60
    %p62 = scmp.eq.s32.totalorder %s15, 0
    %p63 = por %p61, %p62
    %s65 = sadd.s32 %s64, 1
    %p68 = scmp.eq.s32.totalorder %s9, 1
    %p69 = scmp.ne.s32.totalorder %s64, %s66
    %p70 = scmp.eq.s32.totalorder %s9, 0
    %p71 = por %p69, %p70
    %p72 = scmp.ne.s32.totalorder %s64, %s66
    %p73 = scmp.eq.s32.totalorder %s14, 1
    %p74 = por %p72, %p73
    %p75 = scmp.ne.s32.totalorder %s66, %s67
    %p76 = scmp.eq.s32.totalorder %s14, 0
    %p77 = por %p75, %p76
    %p78 = scmp.ne.s32.totalorder %s66, %s67
    %p79 = scmp.eq.s32.totalorder %s15, 1
    %p80 = por %p78, %p79
    %p82 = scmp.ne.s32.totalorder %s67, %s81
    %p83 = scmp.eq.s32.totalorder %s15, 0
    %p84 = por %p82, %p83
    %s85 = ssub.s32 %s9, %s16
    %p86 = scmp.eq.s32.totalorder %s85, 0
    %s88 = sadd.s32 %s87, 1
    %s89 = scalar_select %p86, %s87, %s88
    %p92 = pneg %p86
    %p93 = scmp.eq.s32.totalorder %s9, 1
    %p94 = por %p92, %p93
    %p95 = scmp.ne.s32.totalorder %s87, %s90
    %p96 = scmp.eq.s32.totalorder %s9, 0
    %p97 = por %p95, %p96
    %p98 = scmp.ne.s32.totalorder %s87, %s90
    %p99 = scmp.eq.s32.totalorder %s14, 1
    %p100 = por %p98, %p99
    %p101 = scmp.ne.s32.totalorder %s90, %s91
    %p102 = scmp.eq.s32.totalorder %s14, 0
    %p103 = por %p101, %p102
    %p104 = scmp.ne.s32.totalorder %s90, %s91
    %p105 = scmp.eq.s32.totalorder %s15, 1
    %p106 = por %p104, %p105
    %p108 = scmp.ne.s32.totalorder %s91, %s107
    %p109 = scmp.eq.s32.totalorder %s15, 0
    %p110 = por %p108, %p109
    %p111 = scmp.le.s32.totalorder 1, %s9
    %p112 = scmp.lt.s32.totalorder %s9, 3
    %p113 = pnand %p111, %p112
    %p114 = pneg %p113
    // Predicated region
    $region9: #{pixel_shuffle_upsampling.1} parent=5 // pred_check
      _
    $region10: #{pixel_shuffle_upsampling.1} parent=5 // pred_check_branch
      %116 = sbr.rel (%p113) target = $region12
    $region11: #{pixel_shuffle_upsampling.1} parent=5 // pred_region
      %s117 = ssub.s32 %s9, 1
      // Predicated region
      $region13: #{pixel_shuffle_upsampling.1} parent=11 // pred_check
        %p118 = pneg %p56
      $region14: #{pixel_shuffle_upsampling.1} parent=11 // pred_check_branch
        %120 = sbr.rel (%p118) target = $region16
      $region15: #{pixel_shuffle_upsampling.1} parent=11 // pred_region
        _
      $region16: #{pixel_shuffle_upsampling.1} parent=11 // pred_fallthru
        _
      // Predicated region
      $region17: #{pixel_shuffle_upsampling.1} parent=11 // pred_check
        %p121 = pneg %p77
      $region18: #{pixel_shuffle_upsampling.1} parent=11 // pred_check_branch
        %123 = sbr.rel (%p121) target = $region20
      $region19: #{pixel_shuffle_upsampling.1} parent=11 // pred_region
        _
      $region20: #{pixel_shuffle_upsampling.1} parent=11 // pred_fallthru
        _
    $region12: #{pixel_shuffle_upsampling.1} parent=5 // pred_fallthru
      _
    %p124 = scmp.lt.s32.totalorder %s9, 2
    // Predicated region
    $region21: #{pixel_shuffle_upsampling.1} parent=5 // pred_check
      %p125 = pneg %p124
    $region22: #{pixel_shuffle_upsampling.1} parent=5 // pred_check_branch
      %127 = sbr.rel (%p125) target = $region24
    $region23: #{pixel_shuffle_upsampling.1} parent=5 // pred_region
      // Predicated region
      $region25: #{pixel_shuffle_upsampling.1} parent=23 // pred_check
        %p128 = pneg %p29
      $region26: #{pixel_shuffle_upsampling.1} parent=23 // pred_check_branch
        %130 = sbr.rel (%p128) target = $region28
      $region27: #{pixel_shuffle_upsampling.1} parent=23 // pred_region
        %p131 = scmp.lt.s32.totalorder %s9, 1
        %s132 = scalar_select %p131, %s9, 1
        %s133 = smul.addr %s132, 4
        %s134 = smul.addr %s133, 4
        %s135 = scalar_lea.vmem %s0, %s134
      $region28: #{pixel_shuffle_upsampling.1} parent=23 // pred_fallthru
        _
    $region24: #{pixel_shuffle_upsampling.1} parent=5 // pred_fallthru
      _
    %p136 = scmp.le.s32.totalorder 1, %s9
    %p137 = scmp.lt.s32.totalorder %s9, 3
    %p138 = pnand %p136, %p137
    %p139 = pneg %p138
    // Predicated region
    $region29: #{pixel_shuffle_upsampling.1} parent=5 // pred_check
      _
    $region30: #{pixel_shuffle_upsampling.1} parent=5 // pred_check_branch
      %141 = sbr.rel (%p138) target = $region32
    $region31: #{pixel_shuffle_upsampling.1} parent=5 // pred_region
      %s142 = ssub.s32 %s9, 1
      %p143 = scmp.lt.s32.totalorder %s14, 1
      %s144 = scalar_select %p143, %s14, 1
      %s145 = smul.addr %s144, 4
      %s146 = smul.addr %s145, 4
      %s147 = scalar_lea.vmem %s0, %s146
      %p148 = pneg %p35
      %p149 = pneg %p32
      %p150 = pneg %p56
      %p151 = pneg %p53
      %p152 = pneg %p77
      %p153 = pneg %p74
      %p154 = pneg %p103
      %p155 = pneg %p100
      %p156 = scmp.lt.s32.totalorder %s14, 1
      %s157 = scalar_select %p156, %s14, 1
      %s158 = smul.addr %s157, 6
      %s159 = smul.addr %s158, 8
      %s160 = scalar_lea.vmem %s3, %s159
      %p161 = scmp.lt.s32.totalorder %s14, 1
      %s162 = scalar_select %p161, %s14, 1
      %s163 = smul.addr %s162, 4
      %s164 = smul.addr %s163, 4
      %s165 = scalar_lea.vmem %s0, %s164
      %p166 = scmp.lt.s32.totalorder %s14, 1
      %s167 = scalar_select %p166, %s14, 1
      %s168 = smul.addr %s167, 6
      %s169 = smul.addr %s168, 8
      %s170 = scalar_lea.vmem %s3, %s169
      %v171 = vld [vmem:[%s165] sm:$0xff]
      %v172 = vld [vmem:[%s165 + $0x8] sm:$0xff]
      %173 = vst [vmem:[#allocation2] sm:$0xff] 0.0
      %174 = vst [vmem:[#allocation2 + $0x8] sm:$0xff] 0.0
      %175 = vst [vmem:[#allocation2 + $0x10] sm:$0xff] 0.0
      %176 = vst [vmem:[#allocation2 + $0x18] sm:$0xff] 0.0
      %177 = vst [vmem:[#allocation2 + $0x20] sm:$0xff] 0.0
      %178 = vst [vmem:[#allocation2 + $0x28] sm:$0xff] 0.0
      %179 = vst [vmem:[#allocation2 + $0x30] sm:$0xff] 0.0
      %180 = vst [vmem:[#allocation2 + $0x38] sm:$0xff] 0.0
      %181 = vst [vmem:[#allocation2 + $0x40] sm:$0xff] 0.0
      %182 = vst [vmem:[#allocation2 + $0x48] sm:$0xff] 0.0
      %183 = vst [vmem:[#allocation2 + $0x50] sm:$0xff] 0.0
      %184 = vst [vmem:[#allocation2 + $0x58] sm:$0xff] 0.0
      %185 = vst [vmem:[#allocation2 + $0x60] sm:$0xff] 0.0
      %186 = vst [vmem:[#allocation2 + $0x68] sm:$0xff] 0.0
      %187 = vst [vmem:[#allocation2 + $0x70] sm:$0xff] 0.0
      %188 = vst [vmem:[#allocation2 + $0x78] sm:$0xff] 0.0
      %189 = vst [vmem:[#allocation2 + $0x80] sm:$0xff] 0.0
      %190 = vst [vmem:[#allocation2 + $0x88] sm:$0xff] 0.0
      %191 = vst [vmem:[#allocation2 + $0x90] sm:$0xff] 0.0
      %192 = vst [vmem:[#allocation2 + $0x98] sm:$0xff] 0.0
      %193 = vst [vmem:[#allocation2 + $0xa0] sm:$0xff] 0.0
      %194 = vst [vmem:[#allocation2 + $0xa8] sm:$0xff] 0.0
      %195 = vst [vmem:[#allocation2 + $0xb0] sm:$0xff] 0.0
      %196 = vst [vmem:[#allocation2 + $0xb8] sm:$0xff] 0.0
      %197 = vst [vmem:[#allocation2 + $0xc0] sm:$0xff] 0.0
      %198 = vst [vmem:[#allocation2 + $0xc8] sm:$0xff] 0.0
      %199 = vst [vmem:[#allocation2 + $0xd0] sm:$0xff] 0.0
      %v202 = vcombine.high %v171, %v171
      %204 = vst [vmem:[#allocation2] sm:$0xf] %v171
      %205 = vst [vmem:[#allocation2 + $0x8] sm:$0xf] %v202
      %206 = vst [vmem:[#allocation2 + $0x10] sm:$0xf] %v172
      %v207 = vcombine.high %v172, %v172
      %208 = vrot.lane.b32.xlu0 %v171, 127
      %v209 = vpop.permute.xlu0 %208
      %210 = vrot.lane.b32.xlu0 %v202, 127
      %v211 = vpop.permute.xlu0 %210
      %212 = vrot.lane.b32.xlu0 %v172, 127
      %v213 = vpop.permute.xlu0 %212
      %214 = vrot.lane.b32.xlu0 %v207, 127
      %v215 = vpop.permute.xlu0 %214
      %vm216 = vcmask 1039360
      %v217 = vsel %vm216, %v209, %v211
      %v218 = vsel %vm216, %v211, %v213
      %v219 = vsel %vm216, %v213, %v215
      %223 = vst [vmem:[#allocation2 + $0x18] sm:$0xf] %v217
      %224 = vst [vmem:[#allocation2 + $0x20] sm:$0xf] %v218
      %225 = vst [vmem:[#allocation2 + $0x28] sm:$0xf] %v219
      %226 = vrot.lane.b32.xlu0 %v171, 126
      %v227 = vpop.permute.xlu0 %226
      %228 = vrot.lane.b32.xlu0 %v202, 126
      %v229 = vpop.permute.xlu0 %228
      %230 = vrot.lane.b32.xlu0 %v172, 126
      %v231 = vpop.permute.xlu0 %230
      %232 = vrot.lane.b32.xlu0 %v207, 126
      %v233 = vpop.permute.xlu0 %232
      %vm234 = vcmask 1031168
      %v235 = vsel %vm234, %v227, %v229
      %v236 = vsel %vm234, %v229, %v231
      %v237 = vsel %vm234, %v231, %v233
      %241 = vst [vmem:[#allocation2 + $0x30] sm:$0xf] %v235
      %242 = vst [vmem:[#allocation2 + $0x38] sm:$0xf] %v236
      %243 = vst [vmem:[#allocation2 + $0x40] sm:$0xf] %v237
      %244 = vrot.lane.b32.xlu0 %v171, 104
      %v245 = vpop.permute.xlu0 %244
      %246 = vrot.lane.b32.xlu0 %v202, 104
      %v247 = vpop.permute.xlu0 %246
      %248 = vrot.lane.b32.xlu0 %v172, 104
      %v249 = vpop.permute.xlu0 %248
      %250 = vrot.lane.b32.xlu0 %v207, 104
      %v251 = vpop.permute.xlu0 %250
      %vm252 = vcmask 850944
      %v253 = vsel %vm252, %v245, %v247
      %v254 = vsel %vm252, %v247, %v249
      %v255 = vsel %vm252, %v249, %v251
      %259 = vst [vmem:[#allocation2 + $0x48] sm:$0xf] %v253
      %260 = vst [vmem:[#allocation2 + $0x50] sm:$0xf] %v254
      %261 = vst [vmem:[#allocation2 + $0x58] sm:$0xf] %v255
      %262 = vrot.lane.b32.xlu0 %v171, 103
      %v263 = vpop.permute.xlu0 %262
      %264 = vrot.lane.b32.xlu0 %v202, 103
      %v265 = vpop.permute.xlu0 %264
      %266 = vrot.lane.b32.xlu0 %v172, 103
      %v267 = vpop.permute.xlu0 %266
      %268 = vrot.lane.b32.xlu0 %v207, 103
      %v269 = vpop.permute.xlu0 %268
      %vm270 = vcmask 842752
      %v271 = vsel %vm270, %v263, %v265
      %v272 = vsel %vm270, %v265, %v267
      %v273 = vsel %vm270, %v267, %v269
      %277 = vst [vmem:[#allocation2 + $0x60] sm:$0xf] %v271
      %278 = vst [vmem:[#allocation2 + $0x68] sm:$0xf] %v272
      %279 = vst [vmem:[#allocation2 + $0x70] sm:$0xf] %v273
      %280 = vrot.lane.b32.xlu0 %v171, 102
      %v281 = vpop.permute.xlu0 %280
      %282 = vrot.lane.b32.xlu0 %v202, 102
      %v283 = vpop.permute.xlu0 %282
      %284 = vrot.lane.b32.xlu0 %v172, 102
      %v285 = vpop.permute.xlu0 %284
      %286 = vrot.lane.b32.xlu0 %v207, 102
      %v287 = vpop.permute.xlu0 %286
      %vm288 = vcmask 834560
      %v289 = vsel %vm288, %v281, %v283
      %v290 = vsel %vm288, %v283, %v285
      %v291 = vsel %vm288, %v285, %v287
      %295 = vst [vmem:[#allocation2 + $0x78] sm:$0xf] %v289
      %296 = vst [vmem:[#allocation2 + $0x80] sm:$0xf] %v290
      %297 = vst [vmem:[#allocation2 + $0x88] sm:$0xf] %v291
      %298 = vrot.lane.b32.xlu0 %v171, 80
      %v299 = vpop.permute.xlu0 %298
      %300 = vrot.lane.b32.xlu0 %v202, 80
      %v301 = vpop.permute.xlu0 %300
      %302 = vrot.lane.b32.xlu0 %v172, 80
      %v303 = vpop.permute.xlu0 %302
      %304 = vrot.lane.b32.xlu0 %v207, 80
      %v305 = vpop.permute.xlu0 %304
      %vm306 = vcmask 654336
      %v307 = vsel %vm306, %v299, %v301
      %v308 = vsel %vm306, %v301, %v303
      %v309 = vsel %vm306, %v303, %v305
      %313 = vst [vmem:[#allocation2 + $0x90] sm:$0xf] %v307
      %314 = vst [vmem:[#allocation2 + $0x98] sm:$0xf] %v308
      %315 = vst [vmem:[#allocation2 + $0xa0] sm:$0xf] %v309
      %316 = vrot.lane.b32.xlu0 %v171, 79
      %v317 = vpop.permute.xlu0 %316
      %318 = vrot.lane.b32.xlu0 %v202, 79
      %v319 = vpop.permute.xlu0 %318
      %320 = vrot.lane.b32.xlu0 %v172, 79
      %v321 = vpop.permute.xlu0 %320
      %322 = vrot.lane.b32.xlu0 %v207, 79
      %v323 = vpop.permute.xlu0 %322
      %vm324 = vcmask 646144
      %v325 = vsel %vm324, %v317, %v319
      %v326 = vsel %vm324, %v319, %v321
      %v327 = vsel %vm324, %v321, %v323
      %331 = vst [vmem:[#allocation2 + $0xa8] sm:$0xf] %v325
      %332 = vst [vmem:[#allocation2 + $0xb0] sm:$0xf] %v326
      %333 = vst [vmem:[#allocation2 + $0xb8] sm:$0xf] %v327
      %334 = vrot.lane.b32.xlu0 %v171, 78
      %v335 = vpop.permute.xlu0 %334
      %336 = vrot.lane.b32.xlu0 %v202, 78
      %v337 = vpop.permute.xlu0 %336
      %338 = vrot.lane.b32.xlu0 %v172, 78
      %v339 = vpop.permute.xlu0 %338
      %340 = vrot.lane.b32.xlu0 %v207, 78
      %v341 = vpop.permute.xlu0 %340
      %vm342 = vcmask 637952
      %v343 = vsel %vm342, %v335, %v337
      %v344 = vsel %vm342, %v337, %v339
      %v345 = vsel %vm342, %v339, %v341
      %349 = vst [vmem:[#allocation2 + $0xc0] sm:$0xf] %v343
      %350 = vst [vmem:[#allocation2 + $0xc8] sm:$0xf] %v344
      %351 = vst [vmem:[#allocation2 + $0xd0] sm:$0xf] %v345
      %v352 = vld [vmem:[%s1] sm:$0xff]
      %v353 = vld [vmem:[%s1 + $0x8] sm:$0xff]
      %v354 = vld [vmem:[#allocation2] sm:$0xff]
      %v355 = vld [vmem:[#allocation2 + $0x8] sm:$0xff]
      %v356 = vld [vmem:[#allocation2 + $0x10] sm:$0xff]
      %v357 = vld [vmem:[#allocation2 + $0x18] sm:$0xff]
      %v358 = vld [vmem:[#allocation2 + $0x20] sm:$0xff]
      %v359 = vld [vmem:[#allocation2 + $0x28] sm:$0xff]
      %v360 = vld [vmem:[#allocation2 + $0x30] sm:$0xff]
      %v361 = vld [vmem:[#allocation2 + $0x38] sm:$0xff]
      %v362 = vld [vmem:[#allocation2 + $0x40] sm:$0xff]
      %v363 = vld [vmem:[#allocation2 + $0x48] sm:$0xff]
      %v364 = vld [vmem:[#allocation2 + $0x50] sm:$0xff]
      %v365 = vld [vmem:[#allocation2 + $0x58] sm:$0xff]
      %v366 = vld [vmem:[#allocation2 + $0x60] sm:$0xff]
      %v367 = vld [vmem:[#allocation2 + $0x68] sm:$0xff]
      %v368 = vld [vmem:[#allocation2 + $0x70] sm:$0xff]
      %v369 = vld [vmem:[#allocation2 + $0x78] sm:$0xff]
      %v370 = vld [vmem:[#allocation2 + $0x80] sm:$0xff]
      %v371 = vld [vmem:[#allocation2 + $0x88] sm:$0xff]
      %v372 = vld [vmem:[#allocation2 + $0x90] sm:$0xff]
      %v373 = vld [vmem:[#allocation2 + $0x98] sm:$0xff]
      %v374 = vld [vmem:[#allocation2 + $0xa0] sm:$0xff]
      %v375 = vld [vmem:[#allocation2 + $0xa8] sm:$0xff]
      %v376 = vld [vmem:[#allocation2 + $0xb0] sm:$0xff]
      %v377 = vld [vmem:[#allocation2 + $0xb8] sm:$0xff]
      %v378 = vld [vmem:[#allocation2 + $0xc0] sm:$0xff]
      %v379 = vld [vmem:[#allocation2 + $0xc8] sm:$0xff]
      %v380 = vld [vmem:[#allocation2 + $0xd0] sm:$0xff]
      %v381 = vld [vmem:[%s2] sm:$0xff]
      %v382 = vld [vmem:[%s2 + $0x8] sm:$0xff]
      %384 = vset.pattern.permute.xlu0 0
      %385 = vperm.xlu0 %384, %v381
      %v386 = vpop.permute.xlu0 %385
      %389 = vset.pattern.permute.xlu0 0
      %390 = vperm.xlu0 %389, %v382
      %v391 = vpop.permute.xlu0 %390
      %vm393 = vcmask 588800
      %v395 = vsel %vm393, %v352, 0
      %v398 = vsel %vm393, %v353, 0
      %400 = vmatprep.subr.mxu0 %v355
      %401 = vmatpush1.msra.mxu0 %v354
      %402 = vmatprep.subr.mxu0 %v358
      %403 = vmatpush1.msra.mxu0 %v357
      %404 = vmatprep.subr.mxu0 %v361
      %405 = vmatpush1.msra.mxu0 %v360
      %406 = vmatprep.subr.mxu0 %v364
      %407 = vmatpush1.msra.mxu0 %v363
      %408 = vmatprep.subr.mxu0 %v367
      %409 = vmatpush1.msra.mxu0 %v366
      %410 = vmatprep.subr.mxu0 %v370
      %411 = vmatpush1.msra.mxu0 %v369
      %412 = vmatprep.subr.mxu0 %v373
      %413 = vmatpush1.msra.mxu0 %v372
      %414 = vmatprep.subr.mxu0 %v376
      %415 = vmatpush1.msra.mxu0 %v375
      %416 = vmatprep.subr.mxu0 %v379
      %417 = vmatpush1.msra.mxu0 %v378
      %418 = vmatprep.subr.mxu0 0.0
      %419 = vmatpush1.msra.mxu0 0.0
      %420 = vmatprep.subr.mxu0 0.0
      %421 = vmatpush1.msra.mxu0 0.0
      %422 = vmatprep.subr.mxu0 0.0
      %423 = vmatpush1.msra.mxu0 0.0
      %424 = vmatprep.subr.mxu0 0.0
      %425 = vmatpush1.msra.mxu0 0.0
      %426 = vmatprep.subr.mxu0 0.0
      %427 = vmatpush1.msra.mxu0 0.0
      %428 = vmatprep.subr.mxu0 0.0
      %429 = vmatpush1.msra.mxu0 0.0
      %430 = vmatprep.subr.mxu0 0.0
      %431 = vmatpush1.msra.mxu0 0.0
      %432 = vmatprep.subr.mxu0 0.0
      %433 = vmatpush1.msra.mxu0 0.0
      %434 = vmatprep.subr.mxu0 0.0
      %435 = vmatpush1.msra.mxu0 0.0
      %436 = vmatprep.subr.mxu0 0.0
      %437 = vmatpush1.msra.mxu0 0.0
      %438 = vmatprep.subr.mxu0 0.0
      %439 = vmatpush1.msra.mxu0 0.0
      %440 = vmatprep.subr.mxu0 0.0
      %441 = vmatpush1.msra.mxu0 0.0
      %442 = vmatprep.subr.mxu0 0.0
      %443 = vmatpush1.msra.mxu0 0.0
      %444 = vmatprep.subr.mxu0 0.0
      %445 = vmatpush1.msra.mxu0 0.0
      %446 = vmatprep.subr.mxu0 0.0
      %447 = vmatpush1.msra.mxu0 0.0
      %448 = vmatprep.subr.mxu0 0.0
      %449 = vmatpush1.msra.mxu0 0.0
      %450 = vmatprep.subr.mxu0 0.0
      %451 = vmatpush1.msra.mxu0 0.0
      %452 = vmatprep.subr.mxu0 0.0
      %453 = vmatpush1.msra.mxu0 0.0
      %454 = vmatprep.subr.mxu0 0.0
      %455 = vmatpush1.msra.mxu0 0.0
      %456 = vmatprep.subr.mxu0 0.0
      %457 = vmatpush1.msra.mxu0 0.0
      %458 = vmatprep.subr.mxu0 0.0
      %459 = vmatpush1.msra.mxu0 0.0
      %460 = vmatprep.subr.mxu0 0.0
      %461 = vmatpush1.msra.mxu0 0.0
      %462 = vmatprep.subr.mxu0 0.0
      %463 = vmatpush1.msra.mxu0 0.0
      %464 = vmatprep.mubr.f32.mxu0 0.0
      %465 = vmatmul.mubr.f32.gmra.mrb[0].mxu0 %v395
      %v466 = vpop.f32.mrb[0].mxu0
      %v467 = vadd.f32 %v386, %v466
      %v468 = vpop.f32.mrb[0].mxu0
      %v469 = vadd.f32 %v386, %v468
      %470 = vmatprep.mubr.f32.mxu0 0.0
      %471 = vmatmul.mubr.f32.gmra.mrb[0].mxu0 %v398
      %v472 = vpop.f32.mrb[0].mxu0
      %v473 = vadd.f32 %v391, %v472
      %v474 = vpop.f32.mrb[0].mxu0
      %v475 = vadd.f32 %v391, %v474
      %476 = vdwg.mxu0
      %477 = vmatprep.subr.mxu0 0.0
      %478 = vmatpush1.msra.mxu0 %v356
      %479 = vmatprep.subr.mxu0 0.0
      %480 = vmatpush1.msra.mxu0 %v359
      %481 = vmatprep.subr.mxu0 0.0
      %482 = vmatpush1.msra.mxu0 %v362
      %483 = vmatprep.subr.mxu0 0.0
      %484 = vmatpush1.msra.mxu0 %v365
      %485 = vmatprep.subr.mxu0 0.0
      %486 = vmatpush1.msra.mxu0 %v368
      %487 = vmatprep.subr.mxu0 0.0
      %488 = vmatpush1.msra.mxu0 %v371
      %489 = vmatprep.subr.mxu0 0.0
      %490 = vmatpush1.msra.mxu0 %v374
      %491 = vmatprep.subr.mxu0 0.0
      %492 = vmatpush1.msra.mxu0 %v377
      %493 = vmatprep.subr.mxu0 0.0
      %494 = vmatpush1.msra.mxu0 %v380
      %495 = vmatprep.subr.mxu0 0.0
      %496 = vmatpush1.msra.mxu0 0.0
      %497 = vmatprep.subr.mxu0 0.0
      %498 = vmatpush1.msra.mxu0 0.0
      %499 = vmatprep.subr.mxu0 0.0
      %500 = vmatpush1.msra.mxu0 0.0
      %501 = vmatprep.subr.mxu0 0.0
      %502 = vmatpush1.msra.mxu0 0.0
      %503 = vmatprep.subr.mxu0 0.0
      %504 = vmatpush1.msra.mxu0 0.0
      %505 = vmatprep.subr.mxu0 0.0
      %506 = vmatpush1.msra.mxu0 0.0
      %507 = vmatprep.subr.mxu0 0.0
      %508 = vmatpush1.msra.mxu0 0.0
      %509 = vmatprep.subr.mxu0 0.0
      %510 = vmatpush1.msra.mxu0 0.0
      %511 = vmatprep.subr.mxu0 0.0
      %512 = vmatpush1.msra.mxu0 0.0
      %513 = vmatprep.subr.mxu0 0.0
      %514 = vmatpush1.msra.mxu0 0.0
      %515 = vmatprep.subr.mxu0 0.0
      %516 = vmatpush1.msra.mxu0 0.0
      %517 = vmatprep.subr.mxu0 0.0
      %518 = vmatpush1.msra.mxu0 0.0
      %519 = vmatprep.subr.mxu0 0.0
      %520 = vmatpush1.msra.mxu0 0.0
      %521 = vmatprep.subr.mxu0 0.0
      %522 = vmatpush1.msra.mxu0 0.0
      %523 = vmatprep.subr.mxu0 0.0
      %524 = vmatpush1.msra.mxu0 0.0
      %525 = vmatprep.subr.mxu0 0.0
      %526 = vmatpush1.msra.mxu0 0.0
      %527 = vmatprep.subr.mxu0 0.0
      %528 = vmatpush1.msra.mxu0 0.0
      %529 = vmatprep.subr.mxu0 0.0
      %530 = vmatpush1.msra.mxu0 0.0
      %531 = vmatprep.subr.mxu0 0.0
      %532 = vmatpush1.msra.mxu0 0.0
      %533 = vmatprep.subr.mxu0 0.0
      %534 = vmatpush1.msra.mxu0 0.0
      %535 = vmatprep.subr.mxu0 0.0
      %536 = vmatpush1.msra.mxu0 0.0
      %537 = vmatprep.subr.mxu0 0.0
      %538 = vmatpush1.msra.mxu0 0.0
      %539 = vmatprep.subr.mxu0 0.0
      %540 = vmatpush1.msra.mxu0 0.0
      %541 = vmatprep.mubr.f32.mxu0 0.0
      %542 = vmatmul.mubr.f32.gmra.mrb[0].mxu0 %v395
      %v543 = vpop.f32.mrb[0].mxu0
      %v544 = vadd.f32 %v386, %v543
      %v545 = vpop.f32.mrb[0].mxu0
      %546 = vmatprep.mubr.f32.mxu0 0.0
      %547 = vmatmul.mubr.f32.gmra.mrb[0].mxu0 %v398
      %v548 = vpop.f32.mrb[0].mxu0
      %v549 = vadd.f32 %v391, %v548
      %v550 = vpop.f32.mrb[0].mxu0
      %551 = vdwg.mxu0
      %v552 = vmax.f32 %v467, 0.0
      %v553 = vmax.f32 %v469, 0.0
      %v554 = vmax.f32 %v544, 0.0
      %v555 = vmax.f32 %v473, 0.0
      %v556 = vmax.f32 %v475, 0.0
      %v557 = vmax.f32 %v549, 0.0
      %558 = vst [vmem:[%s170] sm:$0xff] %v552
      %559 = vst [vmem:[%s170 + $0x8] sm:$0xff] %v553
      %560 = vst [vmem:[%s170 + $0x10] sm:$0xff] %v554
      %561 = vst [vmem:[%s170 + $0x18] sm:$0xff] %v555
      %562 = vst [vmem:[%s170 + $0x20] sm:$0xff] %v556
      %563 = vst [vmem:[%s170 + $0x28] sm:$0xff] %v557
      %p564 = scmp.lt.s32.totalorder %s14, 1
      %s565 = scalar_select %p564, %s14, 1
      %s566 = smul.addr %s565, 6
      %s567 = smul.addr %s566, 8
      %s568 = scalar_lea.vmem %s3, %s567
      // Predicated region
      $region33: #{pixel_shuffle_upsampling.1} parent=31 // pred_check
        %p569 = pneg %p100
      $region34: #{pixel_shuffle_upsampling.1} parent=31 // pred_check_branch
        %571 = sbr.rel (%p569) target = $region36
      $region35: #{pixel_shuffle_upsampling.1} parent=31 // pred_region
        _
      $region36: #{pixel_shuffle_upsampling.1} parent=31 // pred_fallthru
        _
    $region32: #{pixel_shuffle_upsampling.1} parent=5 // pred_fallthru
      _
    %p572 = scmp.le.s32.totalorder 2, %s9
    // Predicated region
    $region37: #{pixel_shuffle_upsampling.1} parent=5 // pred_check
      %p573 = pneg %p572
    $region38: #{pixel_shuffle_upsampling.1} parent=5 // pred_check_branch
      %575 = sbr.rel (%p573) target = $region40
    $region39: #{pixel_shuffle_upsampling.1} parent=5 // pred_region
      %s576 = ssub.s32 %s9, 2
      // Predicated region
      $region41: #{pixel_shuffle_upsampling.1} parent=39 // pred_check
        %p577 = pneg %p106
      $region42: #{pixel_shuffle_upsampling.1} parent=39 // pred_check_branch
        %579 = sbr.rel (%p577) target = $region44
      $region43: #{pixel_shuffle_upsampling.1} parent=39 // pred_region
        %p580 = scmp.lt.s32.totalorder %s15, 1
        %s581 = scalar_select %p580, %s15, 1
        %s582 = smul.addr %s581, 6
        %s583 = smul.addr %s582, 8
        %s584 = scalar_lea.vmem %s3, %s583
      $region44: #{pixel_shuffle_upsampling.1} parent=39 // pred_fallthru
        _
    $region40: #{pixel_shuffle_upsampling.1} parent=5 // pred_fallthru
      _
  $region6: #{pixel_shuffle_upsampling.1} parent=0 // loop_footer
    %s13 = sadd.s32 1, %s9
  $region7: #{pixel_shuffle_upsampling.1} parent=0 // loop_footer_branch
    %8 = sbr.rel target = $region3
  $region8: #{pixel_shuffle_upsampling.1} parent=0 // loop_exit
    _

</llo_original>
